<compile_context>
chip_gen: v5e
topology: v5e:2x2
jax: 0.10.0
libtpu: 0.0.40
codegen_flags: <defaults>
</compile_context>

<pallas_src>
import jax
import jax.numpy as jnp
from jax.experimental import pallas as pl
from jax.experimental.pallas import tpu as pltpu

_LANE = 128


def _h_swish_kernel(x_ref, o_ref):
    x = x_ref[...]
    # h_sigmoid(x) = relu6(x + 3) / 6 ; h_swish(x) = x * h_sigmoid(x)
    # Weakly-typed constants keep everything in x's dtype (bf16 stays bf16).
    hs = jnp.clip(x + 3.0, 0.0, 6.0) / 6.0
    o_ref[...] = (x * hs).astype(o_ref.dtype)


def _round_up(a: int, b: int) -> int:
    return ((a + b - 1) // b) * b


def _call_kernel(x2d: jax.Array, tr: int, vmem_limit: int, donate: bool) -> jax.Array:
    rows, lanes = x2d.shape
    grid = (pl.cdiv(rows, tr),)
    extra = {"input_output_aliases": {0: 0}} if donate else {}
    return pl.pallas_call(
        _h_swish_kernel,
        out_shape=jax.ShapeDtypeStruct((rows, lanes), x2d.dtype),
        grid_spec=pltpu.PrefetchScalarGridSpec(
            num_scalar_prefetch=0,
            grid=grid,
            in_specs=[pl.BlockSpec((tr, lanes), lambda i: (i, 0))],
            out_specs=pl.BlockSpec((tr, lanes), lambda i: (i, 0)),
        ),
        compiler_params=pltpu.CompilerParams(
            dimension_semantics=("parallel",),
            vmem_limit_bytes=vmem_limit,
        ),
        **extra,
    )(x2d)


def _select_tile(rows: int, dtype, row_tile: int):
    """Pick a row-tile (multiple of the sublane pack) and a VMEM limit."""
    itemsize = jnp.dtype(dtype).itemsize
    # Sublane packing: f32 -> 8, bf16/f16 -> 16, fp8 -> 32.
    sub = {4: 8, 2: 16, 1: 32}.get(itemsize, 8)

    # Generation-aware VMEM budget (v7x: 64 MiB physical; v5e/v6e: 128 MiB).
    try:
        vmem_cap = int(pltpu.get_tpu_info().vmem_capacity_bytes)
    except Exception:  # pragma: no cover - conservative fallback (v7x per-TC)
        vmem_cap = 64 << 20
    vmem_budget = max(min((vmem_cap * 2) // 3, 96 << 20), 16 << 20)

    headroom = 4 << 20
    # 2x double-buffered input + output = 4 blocks resident.
    max_block_bytes = max((vmem_budget - headroom) // 4, sub * _LANE * itemsize)
    tr_cap = max(((max_block_bytes // (_LANE * itemsize)) // sub) * sub, sub)
    tr_big = max((min(row_tile, tr_cap) // sub) * sub, sub)

    if rows > tr_big:
        tr = tr_big
    elif rows * _LANE * itemsize >= (2 << 20):
        # Medium input: two grid steps so both v7x TensorCores can get work,
        # but only when each half is >= ~1 MiB (never hurts single-TC chips
        # by more than one 0.35 us step on a >=1 MiB transfer).
        half = _round_up(pl.cdiv(rows, 2), sub)
        tr = half if half < rows else rows
    else:
        # Small input: one full-extent block, minimal fixed overhead.
        tr = rows

    block_bytes = tr * _LANE * itemsize
    vmem_limit = int(min(max(4 * block_bytes + headroom, 16 << 20), vmem_budget))
    return tr, vmem_limit


def h_swish(x: jax.Array, *, row_tile: int = 16384, donate_input: bool = False) -> jax.Array:
    """Elementwise hard-swish, x * relu6(x + 3) / 6, computed in a Pallas kernel."""
    orig_shape = x.shape
    orig_dtype = x.dtype
    if not jnp.issubdtype(orig_dtype, jnp.floating):
        # PyTorch h_swish on integer tensors promotes to float; we only
        # support floating inputs to keep dtype-preserving semantics.
        raise TypeError(f"h_swish Pallas kernel expects a floating dtype, got {orig_dtype}")

    n = x.size
    if n == 0:
        return x

    x_flat = x.reshape(-1)
    tail_len = n % _LANE
    bulk = n - tail_len

    if bulk == 0:
        # Fewer than 128 elements: single full-extent (1, n) block.
        out2d = _call_kernel(x_flat.reshape(1, n), tr=1,
                             vmem_limit=16 << 20, donate=False)
        return out2d.reshape(orig_shape)

    rows = bulk // _LANE
    tr, vmem_limit = _select_tile(rows, orig_dtype, row_tile)

    x_bulk = x_flat if tail_len == 0 else x_flat[:bulk]
    out_bulk = _call_kernel(
        x_bulk.reshape(rows, _LANE), tr=tr, vmem_limit=vmem_limit,
        donate=donate_input and tail_len == 0,
    )

    if tail_len == 0:
        return out_bulk.reshape(orig_shape)

    # Ragged tail (< 128 elements): compute directly, stitch onto the bulk.
    x_tail = x_flat[bulk:]
    out_tail = (x_tail * (jnp.clip(x_tail + 3.0, 0.0, 6.0) / 6.0)).astype(orig_dtype)
    return jnp.concatenate([out_bulk.reshape(-1), out_tail]).reshape(orig_shape)


def _h_swish_ref(x):
    return x * (jnp.clip(x + 3.0, 0.0, 6.0) / 6.0)


if __name__ == "__main__":
    key = jax.random.PRNGKey(0)
    # NCHW, matching the PyTorch convention in the spec.
    x = jax.random.normal(key, (2, 4, 16, 16), dtype=jnp.float32) * 4.0

    out = jax.block_until_ready(h_swish(x))
    ref = _h_swish_ref(x)
    assert out.shape == x.shape and out.dtype == x.dtype
    assert jnp.allclose(out, ref, atol=1e-5, rtol=1e-5), "mismatch vs reference"

    # Ragged flat size (not a multiple of 128): bulk-kernel + jnp tail path.
    x2 = jax.random.normal(jax.random.PRNGKey(1), (3, 5, 7, 11), dtype=jnp.float32) * 4.0
    out2 = jax.block_until_ready(h_swish(x2))
    assert jnp.allclose(out2, _h_swish_ref(x2), atol=1e-5, rtol=1e-5), "mismatch (ragged)"

    # bf16 aligned path (dtype-preserving math).
    x3 = jax.random.normal(jax.random.PRNGKey(2), (2, 8, 16, 16), dtype=jnp.bfloat16) * 4.0
    out3 = jax.block_until_ready(h_swish(x3))
    assert out3.dtype == jnp.bfloat16 and out3.shape == x3.shape
    assert jnp.allclose(out3.astype(jnp.float32),
                        _h_swish_ref(x3).astype(jnp.float32),
                        atol=3e-2, rtol=3e-2), "mismatch (bf16)"

    print("KERNEL_OK")
</pallas_src>

<mosaic_0001>
module attributes {stable_mosaic.version = 11 : i64} {
  func.func @_h_swish_kernel(%arg0: i32, %arg1: memref<16x128xf32, #tpu.memory_space<vmem>>, %arg2: memref<16x128xf32, #tpu.memory_space<vmem>>) attributes {dimension_semantics = [#tpu.dimension_semantics<parallel>], iteration_bounds = array<i64: 1>, scalar_prefetch = 0 : i64, scratch_operands = 0 : i64, tpu.core_type = #tpu.core_type<tc>, window_params = [{transform_indices = @transform_0, window_bounds = array<i64: 16, 128>}, {transform_indices = @transform_1, window_bounds = array<i64: 16, 128>}]} {
    %c0 = arith.constant 0 : index
    %c0_0 = arith.constant 0 : index
    %0 = vector.load %arg1[%c0, %c0_0] : memref<16x128xf32, #tpu.memory_space<vmem>>, vector<16x128xf32>
    %cst = arith.constant 3.000000e+00 : f32
    %1 = vector.broadcast %cst : f32 to vector<16x128xf32>
    %2 = arith.addf %0, %1 : vector<16x128xf32>
    %cst_1 = arith.constant 0.000000e+00 : f32
    %cst_2 = arith.constant 6.000000e+00 : f32
    %3 = vector.broadcast %cst_1 : f32 to vector<16x128xf32>
    %4 = arith.maximumf %3, %2 : vector<16x128xf32>
    %5 = vector.broadcast %cst_2 : f32 to vector<16x128xf32>
    %6 = arith.minimumf %5, %4 : vector<16x128xf32>
    %cst_3 = arith.constant 6.000000e+00 : f32
    %7 = vector.broadcast %cst_3 : f32 to vector<16x128xf32>
    %8 = arith.divf %6, %7 : vector<16x128xf32>
    %9 = arith.mulf %0, %8 : vector<16x128xf32>
    %c0_4 = arith.constant 0 : index
    %c0_5 = arith.constant 0 : index
    %10 = vector.load %arg2[%c0_4, %c0_5] : memref<16x128xf32, #tpu.memory_space<vmem>>, vector<16x128xf32>
    tpu.vector_store %arg2[%c0_4, %c0_5], %9 {strides = array<i32>} : memref<16x128xf32, #tpu.memory_space<vmem>>, vector<16x128xf32>,
    return
  }
  func.func @transform_0(%arg0: i32) -> (i32, i32) {
    %c0_i32 = arith.constant 0 : i32
    %c0_i32_0 = arith.constant 0 : i32
    return %arg0, %c0_i32 : i32, i32
  }
  func.func @transform_1(%arg0: i32) -> (i32, i32) {
    %c0_i32 = arith.constant 0 : i32
    %c0_i32_0 = arith.constant 0 : i32
    return %arg0, %c0_i32 : i32, i32
  }
}

</mosaic_0001>

<llo_original>
// kernel: tpu_custom_call.1
$region0: #{tpu_custom_call.1}
  #allocation0 [shape = 'u32[]', space=smem, size = 0x4, offset = 0x4, fixed_abs, tag = 'smem constant byte address 0x4 - core index']
  #allocation1 [shape = 'u32[72,128]{1,0:T(1,128)}', space=vmem, size = 0x9000, scoped, tag = 'internal scratch']
  %s0 = inlined_call_operand.hbm [shape: f32[16,128], index: 0, kind: input, shape index: {}]
  %s1 = inlined_call_operand.hbm [shape: f32[16,128], index: 1, kind: output, shape index: {}]
  %s2 = sld [smem:[#allocation0]]
  $region18: #{tpu_custom_call.1} parent=0
    _
  %s4 = ssub.s32 1, %s2
  %s5 = scalar_select 0, %s4, %s2
  $region1: #{tpu_custom_call.1} parent=0
    #allocation2 [shape = 'u8[8192]{0}', space=vmem, size = 0x2000, scoped, tag = 'input window, operand 0, single buffered']
    #allocation3 [shape = 's32[1]{0}', space=sflag, size = 0x4, scoped, tag = 'scoped memory for tpu_custom_call.1']
    #allocation4 [shape = 's32[1]{0}', space=sflag, size = 0x4, scoped, tag = 'scoped memory for tpu_custom_call.1']
    #allocation5 [shape = 'u8[8192]{0}', space=vmem, size = 0x2000, scoped, tag = 'output window, operand 0, single buffered']
    %6 = vsyncpa [#allocation3], 0
    %7 = vsyncpa [#allocation4], 0
    // Predicated region
    $region2: #{tpu_custom_call.1} parent=1 // pred_check
      _
    $region3: #{tpu_custom_call.1} parent=1 // pred_check_branch
      %9 = sbr.rel (0) target = $region5
    $region4: #{tpu_custom_call.1} parent=1 // pred_region
      %11 = vsyncadd [#allocation3], 0
      %s12 = sshll.u32 %s0, 4
      %s13 = int_to_ptr.hbm [resolvable:$true] %s12
      %s14 = sshll.u32 [#allocation2], 4
      %s15 = int_to_ptr.vmem [resolvable:$true] %s14
      %20 = dma.hbm_to_vmem [thread:$0]  %s13, 256, %s15, [#allocation3], 128, 128, 8
    $region5: #{tpu_custom_call.1} parent=1 // pred_fallthru
      _
    // Predicated region
    $region6: #{tpu_custom_call.1} parent=1 // pred_check
      _
    $region7: #{tpu_custom_call.1} parent=1 // pred_check_branch
      %22 = sbr.rel (0) target = $region9
    $region8: #{tpu_custom_call.1} parent=1 // pred_region
      %24 = dma.done [#allocation3], 256
    $region9: #{tpu_custom_call.1} parent=1 // pred_fallthru
      _
    %v25 = vld [vmem:[#allocation2] sm:$0xff]
    %v26 = vld [vmem:[#allocation2 + $0x8] sm:$0xff]
    %v27 = vadd.f32 %v25, 3.0
    %v28 = vadd.f32 %v26, 3.0
    %v29 = vmax.f32 %v27, 0.0
    %v30 = vmax.f32 %v28, 0.0
    %v31 = vmin.f32 %v29, 6.0
    %v32 = vmin.f32 %v30, 6.0
    %v33 = vrcp.pop 6.0
    %v34 = vmul.f32 6.0, %v33
    %v35 = vsub.f32 1.0, %v34
    %v36 = vmul.f32 %v33, %v35
    %v37 = vadd.f32 %v33, %v36
    %vm38 = vweird.f32 %v33
    %v39 = vsel %vm38, %v33, %v37
    %v40 = vmul.f32 %v31, %v39
    %v41 = vmul.f32 %v32, %v39
    %v42 = vmul.f32 %v25, %v40
    %v43 = vmul.f32 %v26, %v41
    %44 = vst [vmem:[#allocation5] sm:$0xff] %v42
    %45 = vst [vmem:[#allocation5 + $0x8] sm:$0xff] %v43
    // Predicated region
    $region10: #{tpu_custom_call.1} parent=1 // pred_check
      _
    $region11: #{tpu_custom_call.1} parent=1 // pred_check_branch
      %47 = sbr.rel (0) target = $region13
    $region12: #{tpu_custom_call.1} parent=1 // pred_region
      %49 = vsyncadd [#allocation4], 0
      %s50 = sshll.u32 [#allocation5], 4
      %s51 = int_to_ptr.vmem [resolvable:$true] %s50
      %s52 = sshll.u32 %s1, 4
      %s53 = int_to_ptr.hbm [resolvable:$true] %s52
      %58 = dma.vmem_to_hbm [thread:$0]  %s51, 256, %s53, [#allocation4], 128, 128, 8
    $region13: #{tpu_custom_call.1} parent=1 // pred_fallthru
      _
    // Predicated region
    $region14: #{tpu_custom_call.1} parent=1 // pred_check
      _
    $region15: #{tpu_custom_call.1} parent=1 // pred_check_branch
      %60 = sbr.rel (0) target = $region17
    $region16: #{tpu_custom_call.1} parent=1 // pred_region
      %62 = dma.done [#allocation4], 256
    $region17: #{tpu_custom_call.1} parent=1 // pred_fallthru
      _
    %63 = vsyncpa [#allocation3], 1
    %64 = vsyncpa [#allocation4], 1

</llo_original>
